<compile_context>
chip_gen: v6e
topology: v6e:2x2x1
jax: 0.10.0
libtpu: 0.0.40
codegen_flags: <defaults>
</compile_context>

<pallas_src>
import functools

import jax
import jax.numpy as jnp
from jax.experimental import pallas as pl
from jax.experimental.pallas import tpu as pltpu


def _round_up(x, m):
    return ((x + m - 1) // m) * m


def _gelu_exact(x):
    # matches torch.nn.GELU() default (erf-based, not tanh approximation)
    return 0.5 * x * (1.0 + jax.lax.erf(x * jnp.float32(0.7071067811865476)))


def _early_fusion_kernel(text_ref, img_ref, wp_ref, bp_ref,
                         gt_ref, gi_ref, bt_ref, bi_ref,
                         wt_ref, wi_ref, bc_ref, out_ref,
                         *, d_text, eps):
    # Cast everything to f32 so LN statistics / matmuls accumulate in f32 even
    # if the inputs arrive as bf16.
    text = text_ref[...].astype(jnp.float32)          # [TB, D]
    img = img_ref[...].astype(jnp.float32)            # [TB, N, Din]

    # (1) mean-pool image tokens  -> [TB, Din]
    img_mean = jnp.mean(img, axis=1)

    # (2) image projector: Linear(Din -> D)
    img_emb = (jnp.dot(img_mean, wp_ref[...].astype(jnp.float32),
                       preferred_element_type=jnp.float32)
               + bp_ref[...].astype(jnp.float32))     # [TB, D]

    # (3) LayerNorm over the virtual concat [text, img_emb] of width 2*D
    two_d = jnp.float32(2 * d_text)
    s = (jnp.sum(text, axis=1, keepdims=True)
         + jnp.sum(img_emb, axis=1, keepdims=True))
    mean = s / two_d
    sq = (jnp.sum((text - mean) ** 2, axis=1, keepdims=True)
          + jnp.sum((img_emb - mean) ** 2, axis=1, keepdims=True))
    inv = jax.lax.rsqrt(sq / two_d + jnp.float32(eps))

    nt = (text - mean) * inv * gt_ref[...] + bt_ref[...]
    ni = (img_emb - mean) * inv * gi_ref[...] + bi_ref[...]

    # (4) exact GELU (dropout is identity in eval mode)
    ht = _gelu_exact(nt)
    hi = _gelu_exact(ni)

    # (5) classifier Linear(2D -> C_pad), split across the two halves of W
    logits = (jnp.dot(ht, wt_ref[...], preferred_element_type=jnp.float32)
              + jnp.dot(hi, wi_ref[...], preferred_element_type=jnp.float32)
              + bc_ref[...])
    out_ref[...] = logits.astype(out_ref.dtype)


def _pick_block_b(batch, n_tok, d_img, d_text, c_pad):
    # Size the batch tile from a per-buffer VMEM budget that also fits v7x
    # (64 MiB/TC): ~12 MiB per pipeline buffer for the streamed tensors leaves
    # plenty of headroom for the resident weights and double buffering.
    row_bytes = (n_tok * d_img + d_text + c_pad) * 4
    per_buffer_budget = 12 * 1024 * 1024
    tb = per_buffer_budget // max(row_bytes, 1)
    tb = max(8, (tb // 8) * 8)
    tb = min(tb, 1024)                       # no point going huge; grid is a loop
    tb = min(tb, _round_up(batch, 8))        # don't exceed (padded) batch
    return tb


def multimodal_early_forward(text_emb, img_feats, params, *, block_b=None, eps=1e-5):
    """text_emb: [B, D_text]; img_feats: [B, N, D_img]  ->  logits [B, C] (f32)."""
    B, d_text = text_emb.shape
    _, n_tok, d_img = img_feats.shape
    num_classes = params["w_cls"].shape[1]

    # Lane-dense classifier output: pad C up to a multiple of 128.
    c_pad = _round_up(num_classes, 128)

    if block_b is None:
        block_b = _pick_block_b(B, n_tok, d_img, d_text, c_pad)
    b_pad = _round_up(B, block_b)

    # Pad batch with zero rows (sliced off afterwards; LN of a zero row is finite).
    if b_pad != B:
        text_emb = jnp.pad(text_emb, ((0, b_pad - B), (0, 0)))
        img_feats = jnp.pad(img_feats, ((0, b_pad - B), (0, 0), (0, 0)))

    # Pre-split LN params and classifier weight into text/img halves (wrapper-side,
    # free for XLA) so the kernel does no lane/sublane slicing.
    g_t = params["ln_gamma"][:, :d_text]
    g_i = params["ln_gamma"][:, d_text:]
    be_t = params["ln_beta"][:, :d_text]
    be_i = params["ln_beta"][:, d_text:]
    w_t = jnp.pad(params["w_cls"][:d_text, :], ((0, 0), (0, c_pad - num_classes)))
    w_i = jnp.pad(params["w_cls"][d_text:, :], ((0, 0), (0, c_pad - num_classes)))
    b_c = jnp.pad(params["b_cls"], ((0, 0), (0, c_pad - num_classes)))

    kernel = functools.partial(_early_fusion_kernel, d_text=d_text, eps=eps)

    # Streamed (batch-tiled) tensors.
    text_spec = pl.BlockSpec((block_b, d_text), lambda i: (i, 0))
    img_spec = pl.BlockSpec((block_b, n_tok, d_img), lambda i: (i, 0, 0))
    out_spec = pl.BlockSpec((block_b, c_pad), lambda i: (i, 0))
    # Resident (constant index_map) parameter tensors.
    wp_spec = pl.BlockSpec((d_img, d_text), lambda i: (0, 0))
    vec_d = pl.BlockSpec((1, d_text), lambda i: (0, 0))
    wc_spec = pl.BlockSpec((d_text, c_pad), lambda i: (0, 0))
    vec_c = pl.BlockSpec((1, c_pad), lambda i: (0, 0))

    # VMEM limit: double-buffered streamed tiles + resident weights + headroom.
    tile_bytes = block_b * (n_tok * d_img + d_text + c_pad) * 4
    weight_bytes = (d_img * d_text + 6 * d_text + 2 * d_text * c_pad + c_pad) * 4
    vmem_limit = min(64 * 1024 * 1024,
                     max(4 * tile_bytes + 2 * weight_bytes + (2 << 20),
                         16 * 1024 * 1024))

    cost = pl.CostEstimate(
        flops=int(2 * b_pad * d_img * d_text
                  + 2 * b_pad * 2 * d_text * c_pad
                  + b_pad * n_tok * d_img),
        transcendentals=int(b_pad * 2 * d_text),
        bytes_accessed=int(4 * (b_pad * (n_tok * d_img + d_text + c_pad)
                                + d_img * d_text + 6 * d_text
                                + 2 * d_text * c_pad + c_pad)),
    )

    logits_padded = pl.pallas_call(
        kernel,
        out_shape=jax.ShapeDtypeStruct((b_pad, c_pad), jnp.float32),
        grid=(b_pad // block_b,),
        in_specs=[text_spec, img_spec,
                  wp_spec, vec_d,
                  vec_d, vec_d, vec_d, vec_d,
                  wc_spec, wc_spec, vec_c],
        out_specs=out_spec,
        compiler_params=pltpu.CompilerParams(
            dimension_semantics=("parallel",),
            vmem_limit_bytes=int(vmem_limit)),
        cost_estimate=cost,
    )(
        text_emb, img_feats,
        params["w_proj"], params["b_proj"],
        g_t, g_i, be_t, be_i,
        w_t, w_i, b_c,
    )
    return logits_padded[:B, :num_classes]


def init_params(key, d_img, d_text, num_classes):
    k1, k2, k3, k4 = jax.random.split(key, 4)
    lim_p = 1.0 / jnp.sqrt(d_img)
    lim_c = 1.0 / jnp.sqrt(2 * d_text)
    return {
        # img_projector: Linear(d_img -> d_text)
        "w_proj": jax.random.uniform(k1, (d_img, d_text), jnp.float32, -lim_p, lim_p),
        "b_proj": jax.random.uniform(k2, (1, d_text), jnp.float32, -lim_p, lim_p),
        # classifier[0]: LayerNorm(2*d_text)
        "ln_gamma": jnp.ones((1, 2 * d_text), jnp.float32),
        "ln_beta": jnp.zeros((1, 2 * d_text), jnp.float32),
        # classifier[3]: Linear(2*d_text -> num_classes)
        "w_cls": jax.random.uniform(k3, (2 * d_text, num_classes), jnp.float32, -lim_c, lim_c),
        "b_cls": jax.random.uniform(k4, (1, num_classes), jnp.float32, -lim_c, lim_c),
    }


def reference_forward(text_emb, img_feats, params):
    img_mean = jnp.mean(img_feats, axis=1)
    img_emb = img_mean @ params["w_proj"] + params["b_proj"][0]
    fuse = jnp.concatenate([text_emb, img_emb], axis=1)
    mu = jnp.mean(fuse, axis=-1, keepdims=True)
    var = jnp.mean((fuse - mu) ** 2, axis=-1, keepdims=True)
    normed = (fuse - mu) / jnp.sqrt(var + 1e-5) * params["ln_gamma"][0] + params["ln_beta"][0]
    h = 0.5 * normed * (1.0 + jax.lax.erf(normed / jnp.sqrt(2.0)))
    return h @ params["w_cls"] + params["b_cls"][0]


if __name__ == "__main__":
    B, N, D_IMG, D_TEXT, NUM_CLASSES = 2, 4, 48, 32, 3

    key = jax.random.PRNGKey(0)
    k_text, k_img, k_params = jax.random.split(key, 3)

    # text_emb stands in for ClipTextEncoder(texts, return_cls_only=True)
    text_emb = jax.random.normal(k_text, (B, D_TEXT), jnp.float32)
    img_feats = jax.random.normal(k_img, (B, N, D_IMG), jnp.float32)
    params = init_params(k_params, D_IMG, D_TEXT, NUM_CLASSES)

    logits = multimodal_early_forward(text_emb, img_feats, params)
    jax.block_until_ready(logits)

    ref = reference_forward(text_emb, img_feats, params)
    assert logits.shape == (B, NUM_CLASSES), logits.shape
    assert jnp.allclose(logits, ref, atol=1e-4, rtol=1e-4), (logits, ref)

    print("KERNEL_OK")
</pallas_src>

<mosaic_0001>
module attributes {stable_mosaic.version = 11 : i64} {
  func.func @_early_fusion_kernel(%arg0: i32, %arg1: memref<8x32xf32, #tpu.memory_space<vmem>>, %arg2: memref<8x4x48xf32, #tpu.memory_space<vmem>>, %arg3: memref<48x32xf32, #tpu.memory_space<vmem>>, %arg4: memref<1x32xf32, #tpu.memory_space<vmem>>, %arg5: memref<1x32xf32, #tpu.memory_space<vmem>>, %arg6: memref<1x32xf32, #tpu.memory_space<vmem>>, %arg7: memref<1x32xf32, #tpu.memory_space<vmem>>, %arg8: memref<1x32xf32, #tpu.memory_space<vmem>>, %arg9: memref<32x128xf32, #tpu.memory_space<vmem>>, %arg10: memref<32x128xf32, #tpu.memory_space<vmem>>, %arg11: memref<1x128xf32, #tpu.memory_space<vmem>>, %arg12: memref<8x128xf32, #tpu.memory_space<vmem>>) attributes {dimension_semantics = [#tpu.dimension_semantics<parallel>], iteration_bounds = array<i64: 1>, scalar_prefetch = 0 : i64, scratch_operands = 0 : i64, tpu.core_type = #tpu.core_type<tc>, window_params = [{transform_indices = @transform_0, window_bounds = array<i64: 8, 32>}, {transform_indices = @transform_1, window_bounds = array<i64: 8, 4, 48>}, {pipeline_mode = #tpu.pipeline_mode<synchronous>, transform_indices = @transform_2, window_bounds = array<i64: 48, 32>}, {pipeline_mode = #tpu.pipeline_mode<synchronous>, transform_indices = @transform_3, window_bounds = array<i64: 1, 32>}, {pipeline_mode = #tpu.pipeline_mode<synchronous>, transform_indices = @transform_4, window_bounds = array<i64: 1, 32>}, {pipeline_mode = #tpu.pipeline_mode<synchronous>, transform_indices = @transform_5, window_bounds = array<i64: 1, 32>}, {pipeline_mode = #tpu.pipeline_mode<synchronous>, transform_indices = @transform_6, window_bounds = array<i64: 1, 32>}, {pipeline_mode = #tpu.pipeline_mode<synchronous>, transform_indices = @transform_7, window_bounds = array<i64: 1, 32>}, {pipeline_mode = #tpu.pipeline_mode<synchronous>, transform_indices = @transform_8, window_bounds = array<i64: 32, 128>}, {pipeline_mode = #tpu.pipeline_mode<synchronous>, transform_indices = @transform_9, window_bounds = array<i64: 32, 128>}, {pipeline_mode = #tpu.pipeline_mode<synchronous>, transform_indices = @transform_10, window_bounds = array<i64: 1, 128>}, {transform_indices = @transform_11, window_bounds = array<i64: 8, 128>}]} {
    %c0 = arith.constant 0 : index
    %c0_0 = arith.constant 0 : index
    %0 = vector.load %arg1[%c0, %c0_0] : memref<8x32xf32, #tpu.memory_space<vmem>>, vector<8x32xf32>
    %c0_1 = arith.constant 0 : index
    %c0_2 = arith.constant 0 : index
    %c0_3 = arith.constant 0 : index
    %1 = vector.load %arg2[%c0_1, %c0_2, %c0_3] : memref<8x4x48xf32, #tpu.memory_space<vmem>>, vector<8x4x48xf32>
    %cst = arith.constant dense<0.000000e+00> : vector<8x48xf32>
    %2 = vector.multi_reduction <add>, %1, %cst [1] : vector<8x4x48xf32> to vector<8x48xf32>
    %cst_4 = arith.constant 4.000000e+00 : f32
    %3 = vector.broadcast %cst_4 : f32 to vector<8x48xf32>
    %4 = arith.divf %2, %3 : vector<8x48xf32>
    %c0_5 = arith.constant 0 : index
    %c0_6 = arith.constant 0 : index
    %5 = vector.load %arg3[%c0_5, %c0_6] : memref<48x32xf32, #tpu.memory_space<vmem>>, vector<48x32xf32>
    %cst_7 = arith.constant dense<0.000000e+00> : vector<8x32xf32>
    %6 = tpu.matmul %4, %5, %cst_7 {dimension_numbers = #tpu.dot_dimension_numbers<[1], [0], [0], [1], [0, 0, 1, 1], [], []>} : vector<8x48xf32>, vector<48x32xf32>, vector<8x32xf32> -> vector<8x32xf32>
    %c0_8 = arith.constant 0 : index
    %c0_9 = arith.constant 0 : index
    %7 = vector.load %arg4[%c0_8, %c0_9] : memref<1x32xf32, #tpu.memory_space<vmem>>, vector<1x32xf32>
    %8 = vector.broadcast %7 : vector<1x32xf32> to vector<8x32xf32>
    %9 = arith.addf %6, %8 : vector<8x32xf32>
    %cst_10 = arith.constant dense<0.000000e+00> : vector<8xf32>
    %10 = vector.multi_reduction <add>, %0, %cst_10 [1] : vector<8x32xf32> to vector<8xf32>
    %11 = vector.shape_cast %10 : vector<8xf32> to vector<8x1xf32>
    %cst_11 = arith.constant dense<0.000000e+00> : vector<8xf32>
    %12 = vector.multi_reduction <add>, %9, %cst_11 [1] : vector<8x32xf32> to vector<8xf32>
    %13 = vector.shape_cast %12 : vector<8xf32> to vector<8x1xf32>
    %14 = arith.addf %11, %13 : vector<8x1xf32>
    %cst_12 = arith.constant 6.400000e+01 : f32
    %15 = vector.broadcast %cst_12 : f32 to vector<8x1xf32>
    %16 = arith.divf %14, %15 : vector<8x1xf32>
    %17 = vector.broadcast %16 : vector<8x1xf32> to vector<8x32xf32>
    %18 = arith.subf %0, %17 : vector<8x32xf32>
    %19 = arith.mulf %18, %18 : vector<8x32xf32>
    %cst_13 = arith.constant dense<0.000000e+00> : vector<8xf32>
    %20 = vector.multi_reduction <add>, %19, %cst_13 [1] : vector<8x32xf32> to vector<8xf32>
    %21 = vector.shape_cast %20 : vector<8xf32> to vector<8x1xf32>
    %22 = vector.broadcast %16 : vector<8x1xf32> to vector<8x32xf32>
    %23 = arith.subf %9, %22 : vector<8x32xf32>
    %24 = arith.mulf %23, %23 : vector<8x32xf32>
    %cst_14 = arith.constant dense<0.000000e+00> : vector<8xf32>
    %25 = vector.multi_reduction <add>, %24, %cst_14 [1] : vector<8x32xf32> to vector<8xf32>
    %26 = vector.shape_cast %25 : vector<8xf32> to vector<8x1xf32>
    %27 = arith.addf %21, %26 : vector<8x1xf32>
    %cst_15 = arith.constant 6.400000e+01 : f32
    %28 = vector.broadcast %cst_15 : f32 to vector<8x1xf32>
    %29 = arith.divf %27, %28 : vector<8x1xf32>
    %cst_16 = arith.constant 9.99999974E-6 : f32
    %30 = vector.broadcast %cst_16 : f32 to vector<8x1xf32>
    %31 = arith.addf %29, %30 : vector<8x1xf32>
    %32 = math.rsqrt %31 : vector<8x1xf32>
    %33 = vector.broadcast %16 : vector<8x1xf32> to vector<8x32xf32>
    %34 = arith.subf %0, %33 : vector<8x32xf32>
    %35 = vector.broadcast %32 : vector<8x1xf32> to vector<8x32xf32>
    %36 = arith.mulf %34, %35 : vector<8x32xf32>
    %c0_17 = arith.constant 0 : index
    %c0_18 = arith.constant 0 : index
    %37 = vector.load %arg5[%c0_17, %c0_18] : memref<1x32xf32, #tpu.memory_space<vmem>>, vector<1x32xf32>
    %38 = vector.broadcast %37 : vector<1x32xf32> to vector<8x32xf32>
    %39 = arith.mulf %36, %38 : vector<8x32xf32>
    %c0_19 = arith.constant 0 : index
    %c0_20 = arith.constant 0 : index
    %40 = vector.load %arg7[%c0_19, %c0_20] : memref<1x32xf32, #tpu.memory_space<vmem>>, vector<1x32xf32>
    %41 = vector.broadcast %40 : vector<1x32xf32> to vector<8x32xf32>
    %42 = arith.addf %39, %41 : vector<8x32xf32>
    %43 = vector.broadcast %16 : vector<8x1xf32> to vector<8x32xf32>
    %44 = arith.subf %9, %43 : vector<8x32xf32>
    %45 = vector.broadcast %32 : vector<8x1xf32> to vector<8x32xf32>
    %46 = arith.mulf %44, %45 : vector<8x32xf32>
    %c0_21 = arith.constant 0 : index
    %c0_22 = arith.constant 0 : index
    %47 = vector.load %arg6[%c0_21, %c0_22] : memref<1x32xf32, #tpu.memory_space<vmem>>, vector<1x32xf32>
    %48 = vector.broadcast %47 : vector<1x32xf32> to vector<8x32xf32>
    %49 = arith.mulf %46, %48 : vector<8x32xf32>
    %c0_23 = arith.constant 0 : index
    %c0_24 = arith.constant 0 : index
    %50 = vector.load %arg8[%c0_23, %c0_24] : memref<1x32xf32, #tpu.memory_space<vmem>>, vector<1x32xf32>
    %51 = vector.broadcast %50 : vector<1x32xf32> to vector<8x32xf32>
    %52 = arith.addf %49, %51 : vector<8x32xf32>
    %cst_25 = arith.constant 5.000000e-01 : f32
    %53 = vector.broadcast %cst_25 : f32 to vector<8x32xf32>
    %54 = arith.mulf %53, %42 : vector<8x32xf32>
    %cst_26 = arith.constant 0.707106769 : f32
    %55 = vector.broadcast %cst_26 : f32 to vector<8x32xf32>
    %56 = arith.mulf %42, %55 : vector<8x32xf32>
    %57 = math.erf %56 : vector<8x32xf32>
    %cst_27 = arith.constant 1.000000e+00 : f32
    %58 = vector.broadcast %cst_27 : f32 to vector<8x32xf32>
    %59 = arith.addf %58, %57 : vector<8x32xf32>
    %60 = arith.mulf %54, %59 : vector<8x32xf32>
    %cst_28 = arith.constant 5.000000e-01 : f32
    %61 = vector.broadcast %cst_28 : f32 to vector<8x32xf32>
    %62 = arith.mulf %61, %52 : vector<8x32xf32>
    %cst_29 = arith.constant 0.707106769 : f32
    %63 = vector.broadcast %cst_29 : f32 to vector<8x32xf32>
    %64 = arith.mulf %52, %63 : vector<8x32xf32>
    %65 = math.erf %64 : vector<8x32xf32>
    %cst_30 = arith.constant 1.000000e+00 : f32
    %66 = vector.broadcast %cst_30 : f32 to vector<8x32xf32>
    %67 = arith.addf %66, %65 : vector<8x32xf32>
    %68 = arith.mulf %62, %67 : vector<8x32xf32>
    %c0_31 = arith.constant 0 : index
    %c0_32 = arith.constant 0 : index
    %69 = vector.load %arg9[%c0_31, %c0_32] : memref<32x128xf32, #tpu.memory_space<vmem>>, vector<32x128xf32>
    %cst_33 = arith.constant dense<0.000000e+00> : vector<8x128xf32>
    %70 = tpu.matmul %60, %69, %cst_33 {dimension_numbers = #tpu.dot_dimension_numbers<[1], [0], [0], [1], [0, 0, 1, 1], [], []>} : vector<8x32xf32>, vector<32x128xf32>, vector<8x128xf32> -> vector<8x128xf32>
    %c0_34 = arith.constant 0 : index
    %c0_35 = arith.constant 0 : index
    %71 = vector.load %arg10[%c0_34, %c0_35] : memref<32x128xf32, #tpu.memory_space<vmem>>, vector<32x128xf32>
    %cst_36 = arith.constant dense<0.000000e+00> : vector<8x128xf32>
    %72 = tpu.matmul %68, %71, %cst_36 {dimension_numbers = #tpu.dot_dimension_numbers<[1], [0], [0], [1], [0, 0, 1, 1], [], []>} : vector<8x32xf32>, vector<32x128xf32>, vector<8x128xf32> -> vector<8x128xf32>
    %73 = arith.addf %70, %72 : vector<8x128xf32>
    %c0_37 = arith.constant 0 : index
    %c0_38 = arith.constant 0 : index
    %74 = vector.load %arg11[%c0_37, %c0_38] : memref<1x128xf32, #tpu.memory_space<vmem>>, vector<1x128xf32>
    %75 = vector.broadcast %74 : vector<1x128xf32> to vector<8x128xf32>
    %76 = arith.addf %73, %75 : vector<8x128xf32>
    %c0_39 = arith.constant 0 : index
    %c0_40 = arith.constant 0 : index
    %77 = vector.load %arg12[%c0_39, %c0_40] : memref<8x128xf32, #tpu.memory_space<vmem>>, vector<8x128xf32>
    tpu.vector_store %arg12[%c0_39, %c0_40], %76 {strides = array<i32>} : memref<8x128xf32, #tpu.memory_space<vmem>>, vector<8x128xf32>,
    return
  }
  func.func @transform_0(%arg0: i32) -> (i32, i32) {
    %c0_i32 = arith.constant 0 : i32
    %c0_i32_0 = arith.constant 0 : i32
    return %arg0, %c0_i32 : i32, i32
  }
  func.func @transform_1(%arg0: i32) -> (i32, i32, i32) {
    %c0_i32 = arith.constant 0 : i32
    %c0_i32_0 = arith.constant 0 : i32
    %c0_i32_1 = arith.constant 0 : i32
    return %arg0, %c0_i32, %c0_i32_0 : i32, i32, i32
  }
  func.func @transform_2(%arg0: i32) -> (i32, i32) {
    %c0_i32 = arith.constant 0 : i32
    %c0_i32_0 = arith.constant 0 : i32
    %c0_i32_1 = arith.constant 0 : i32
    return %c0_i32, %c0_i32_0 : i32, i32
  }
  func.func @transform_3(%arg0: i32) -> (i32, i32) {
    %c0_i32 = arith.constant 0 : i32
    %c0_i32_0 = arith.constant 0 : i32
    %c0_i32_1 = arith.constant 0 : i32
    return %c0_i32, %c0_i32_0 : i32, i32
  }
  func.func @transform_4(%arg0: i32) -> (i32, i32) {
    %c0_i32 = arith.constant 0 : i32
    %c0_i32_0 = arith.constant 0 : i32
    %c0_i32_1 = arith.constant 0 : i32
    return %c0_i32, %c0_i32_0 : i32, i32
  }
  func.func @transform_5(%arg0: i32) -> (i32, i32) {
    %c0_i32 = arith.constant 0 : i32
    %c0_i32_0 = arith.constant 0 : i32
    %c0_i32_1 = arith.constant 0 : i32
    return %c0_i32, %c0_i32_0 : i32, i32
  }
  func.func @transform_6(%arg0: i32) -> (i32, i32) {
    %c0_i32 = arith.constant 0 : i32
    %c0_i32_0 = arith.constant 0 : i32
    %c0_i32_1 = arith.constant 0 : i32
    return %c0_i32, %c0_i32_0 : i32, i32
  }
  func.func @transform_7(%arg0: i32) -> (i32, i32) {
    %c0_i32 = arith.constant 0 : i32
    %c0_i32_0 = arith.constant 0 : i32
    %c0_i32_1 = arith.constant 0 : i32
    return %c0_i32, %c0_i32_0 : i32, i32
  }
  func.func @transform_8(%arg0: i32) -> (i32, i32) {
    %c0_i32 = arith.constant 0 : i32
    %c0_i32_0 = arith.constant 0 : i32
    %c0_i32_1 = arith.constant 0 : i32
    return %c0_i32, %c0_i32_0 : i32, i32
  }
  func.func @transform_9(%arg0: i32) -> (i32, i32) {
    %c0_i32 = arith.constant 0 : i32
    %c0_i32_0 = arith.constant 0 : i32
    %c0_i32_1 = arith.constant 0 : i32
    return %c0_i32, %c0_i32_0 : i32, i32
  }
  func.func @transform_10(%arg0: i32) -> (i32, i32) {
    %c0_i32 = arith.constant 0 : i32
    %c0_i32_0 = arith.constant 0 : i32
    %c0_i32_1 = arith.constant 0 : i32
    return %c0_i32, %c0_i32_0 : i32, i32
  }
  func.func @transform_11(%arg0: i32) -> (i32, i32) {
    %c0_i32 = arith.constant 0 : i32
    %c0_i32_0 = arith.constant 0 : i32
    return %arg0, %c0_i32 : i32, i32
  }
}

</mosaic_0001>

<llo_original>
// kernel: tpu_custom_call.1
$region0: #{tpu_custom_call.1}
  #allocation0 [shape = 'u32[]', space=smem, size = 0x4, offset = 0x4, fixed_abs, tag = 'smem constant byte address 0x4 - core index']
  #allocation1 [shape = 'u32[144,128]{1,0:T(1,128)}', space=vmem, size = 0x12000, scoped, tag = 'internal scratch']
  %s0 = inlined_call_operand.hbm [shape: f32[8,32], index: 0, kind: input, shape index: {}]
  %s1 = inlined_call_operand.vmem [shape: f32[8,4,48], index: 1, kind: input, shape index: {}]
  %s2 = inlined_call_operand.vmem [shape: f32[48,32], index: 2, kind: input, shape index: {}]
  %s3 = inlined_call_operand.hbm [shape: f32[1,32], index: 3, kind: input, shape index: {}]
  %s4 = inlined_call_operand.hbm [shape: f32[1,32], index: 4, kind: input, shape index: {}]
  %s5 = inlined_call_operand.hbm [shape: f32[1,32], index: 5, kind: input, shape index: {}]
  %s6 = inlined_call_operand.hbm [shape: f32[1,32], index: 6, kind: input, shape index: {}]
  %s7 = inlined_call_operand.hbm [shape: f32[1,32], index: 7, kind: input, shape index: {}]
  %s8 = inlined_call_operand.vmem [shape: f32[32,128], index: 8, kind: input, shape index: {}]
  %s9 = inlined_call_operand.vmem [shape: f32[32,128], index: 9, kind: input, shape index: {}]
  %s10 = inlined_call_operand.vmem [shape: f32[1,128], index: 10, kind: input, shape index: {}]
  %s11 = inlined_call_operand.hbm [shape: f32[8,128], index: 11, kind: output, shape index: {}]
  %s12 = sld [smem:[#allocation0]]
  $region78: #{tpu_custom_call.1} parent=0
    _
  %s14 = ssub.s32 1, %s12
  %s15 = scalar_select 0, %s14, %s12
  $region1: #{tpu_custom_call.1} parent=0
    #allocation2 [shape = 'u8[4096]{0}', space=vmem, size = 0x1000, scoped, tag = 'input window, operand 0, single buffered']
    #allocation3 [shape = 's32[1]{0}', space=sflag, size = 0x4, scoped, tag = 'scoped memory for tpu_custom_call.1']
    #allocation4 [shape = 's32[1]{0}', space=sflag, size = 0x4, scoped, tag = 'scoped memory for tpu_custom_call.1']
    #allocation5 [shape = 'u8[512]{0}', space=vmem, size = 0x400, scoped, tag = 'input window, operand 3, single buffered']
    #allocation6 [shape = 's32[1]{0}', space=sflag, size = 0x4, scoped, tag = 'scoped memory for tpu_custom_call.1']
    #allocation7 [shape = 'u8[512]{0}', space=vmem, size = 0x400, scoped, tag = 'input window, operand 4, single buffered']
    #allocation8 [shape = 'u8[512]{0}', space=vmem, size = 0x400, scoped, tag = 'input window, operand 5, single buffered']
    #allocation9 [shape = 's32[1]{0}', space=sflag, size = 0x4, scoped, tag = 'scoped memory for tpu_custom_call.1']
    #allocation10 [shape = 'u8[512]{0}', space=vmem, size = 0x400, scoped, tag = 'input window, operand 6, single buffered']
    #allocation11 [shape = 'u8[512]{0}', space=vmem, size = 0x400, scoped, tag = 'input window, operand 7, single buffered']
    #allocation12 [shape = 's32[1]{0}', space=sflag, size = 0x4, scoped, tag = 'scoped memory for tpu_custom_call.1']
    #allocation13 [shape = 'u8[4096]{0}', space=vmem, size = 0x1000, scoped, tag = 'output window, operand 0, single buffered']
    %16 = vsyncpa [#allocation3], 0
    %17 = vsyncpa [#allocation6], 0
    %18 = vsyncpa [#allocation9], 0
    %19 = vsyncpa [#allocation12], 0
    %20 = vsyncpa [#allocation4], 0
    // Predicated region
    $region2: #{tpu_custom_call.1} parent=1 // pred_check
      _
    $region3: #{tpu_custom_call.1} parent=1 // pred_check_branch
      %22 = sbr.rel (0) target = $region5
    $region4: #{tpu_custom_call.1} parent=1 // pred_region
      %s24 = ssub.s32 128, 128
      %25 = vsyncadd [#allocation3], %s24
      %s27 = sshll.u32 [#allocation2], 4
      %s28 = int_to_ptr.vmem [resolvable:$true] %s27
      %30 = dma.hbm_to_vmem [thread:$0]  %s0, 128, %s28, [#allocation3]
    $region5: #{tpu_custom_call.1} parent=1 // pred_fallthru
      _
    // Predicated region
    $region6: #{tpu_custom_call.1} parent=1 // pred_check
      _
    $region7: #{tpu_custom_call.1} parent=1 // pred_check_branch
      %32 = sbr.rel (0) target = $region9
    $region8: #{tpu_custom_call.1} parent=1 // pred_region
      _
    $region9: #{tpu_custom_call.1} parent=1 // pred_fallthru
      _
    // Predicated region
    $region10: #{tpu_custom_call.1} parent=1 // pred_check
      _
    $region11: #{tpu_custom_call.1} parent=1 // pred_check_branch
      %34 = sbr.rel (0) target = $region13
    $region12: #{tpu_custom_call.1} parent=1 // pred_region
      _
    $region13: #{tpu_custom_call.1} parent=1 // pred_fallthru
      _
    // Predicated region
    $region14: #{tpu_custom_call.1} parent=1 // pred_check
      _
    $region15: #{tpu_custom_call.1} parent=1 // pred_check_branch
      %36 = sbr.rel (0) target = $region17
    $region16: #{tpu_custom_call.1} parent=1 // pred_region
      %s38 = ssub.s32 16, 16
      %39 = vsyncadd [#allocation6], %s38
      %s41 = sshll.u32 [#allocation5], 4
      %s42 = int_to_ptr.vmem [resolvable:$true] %s41
      %44 = dma.hbm_to_vmem [thread:$0]  %s3, 16, %s42, [#allocation6]
    $region17: #{tpu_custom_call.1} parent=1 // pred_fallthru
      _
    // Predicated region
    $region18: #{tpu_custom_call.1} parent=1 // pred_check
      _
    $region19: #{tpu_custom_call.1} parent=1 // pred_check_branch
      %46 = sbr.rel (0) target = $region21
    $region20: #{tpu_custom_call.1} parent=1 // pred_region
      %s48 = ssub.s32 16, 16
      %49 = vsyncadd [#allocation6], %s48
      %s51 = sshll.u32 [#allocation7], 4
      %s52 = int_to_ptr.vmem [resolvable:$true] %s51
      %54 = dma.hbm_to_vmem [thread:$0]  %s4, 16, %s52, [#allocation6]
    $region21: #{tpu_custom_call.1} parent=1 // pred_fallthru
      _
    // Predicated region
    $region22: #{tpu_custom_call.1} parent=1 // pred_check
      _
    $region23: #{tpu_custom_call.1} parent=1 // pred_check_branch
      %56 = sbr.rel (0) target = $region25
    $region24: #{tpu_custom_call.1} parent=1 // pred_region
      %s58 = ssub.s32 16, 16
      %59 = vsyncadd [#allocation9], %s58
      %s61 = sshll.u32 [#allocation8], 4
      %s62 = int_to_ptr.vmem [resolvable:$true] %s61
      %64 = dma.hbm_to_vmem [thread:$0]  %s5, 16, %s62, [#allocation9]
    $region25: #{tpu_custom_call.1} parent=1 // pred_fallthru
      _
    // Predicated region
    $region26: #{tpu_custom_call.1} parent=1 // pred_check
      _
    $region27: #{tpu_custom_call.1} parent=1 // pred_check_branch
      %66 = sbr.rel (0) target = $region29
    $region28: #{tpu_custom_call.1} parent=1 // pred_region
      %s68 = ssub.s32 16, 16
      %69 = vsyncadd [#allocation9], %s68
      %s71 = sshll.u32 [#allocation10], 4
      %s72 = int_to_ptr.vmem [resolvable:$true] %s71
      %74 = dma.hbm_to_vmem [thread:$0]  %s6, 16, %s72, [#allocation9]
    $region29: #{tpu_custom_call.1} parent=1 // pred_fallthru
      _
    // Predicated region
    $region30: #{tpu_custom_call.1} parent=1 // pred_check
      _
    $region31: #{tpu_custom_call.1} parent=1 // pred_check_branch
      %76 = sbr.rel (0) target = $region33
    $region32: #{tpu_custom_call.1} parent=1 // pred_region
      %s78 = ssub.s32 16, 16
      %79 = vsyncadd [#allocation12], %s78
      %s81 = sshll.u32 [#allocation11], 4
      %s82 = int_to_ptr.vmem [resolvable:$true] %s81
      %84 = dma.hbm_to_vmem [thread:$0]  %s7, 16, %s82, [#allocation12]
    $region33: #{tpu_custom_call.1} parent=1 // pred_fallthru
      _
    // Predicated region
    $region34: #{tpu_custom_call.1} parent=1 // pred_check
      _
    $region35: #{tpu_custom_call.1} parent=1 // pred_check_branch
      %86 = sbr.rel (0) target = $region37
    $region36: #{tpu_custom_call.1} parent=1 // pred_region
      _
    $region37: #{tpu_custom_call.1} parent=1 // pred_fallthru
      _
    // Predicated region
    $region38: #{tpu_custom_call.1} parent=1 // pred_check
      _
    $region39: #{tpu_custom_call.1} parent=1 // pred_check_branch
      %88 = sbr.rel (0) target = $region41
    $region40: #{tpu_custom_call.1} parent=1 // pred_region
      _
    $region41: #{tpu_custom_call.1} parent=1 // pred_fallthru
      _
    // Predicated region
    $region42: #{tpu_custom_call.1} parent=1 // pred_check
      _
    $region43: #{tpu_custom_call.1} parent=1 // pred_check_branch
      %90 = sbr.rel (0) target = $region45
    $region44: #{tpu_custom_call.1} parent=1 // pred_region
      _
    $region45: #{tpu_custom_call.1} parent=1 // pred_fallthru
      _
    // Predicated region
    $region46: #{tpu_custom_call.1} parent=1 // pred_check
      _
    $region47: #{tpu_custom_call.1} parent=1 // pred_check_branch
      %92 = sbr.rel (0) target = $region49
    $region48: #{tpu_custom_call.1} parent=1 // pred_region
      %93 = dma.done [#allocation3], 128
    $region49: #{tpu_custom_call.1} parent=1 // pred_fallthru
      _
    // Predicated region
    $region50: #{tpu_custom_call.1} parent=1 // pred_check
      _
    $region51: #{tpu_custom_call.1} parent=1 // pred_check_branch
      %95 = sbr.rel (0) target = $region53
    $region52: #{tpu_custom_call.1} parent=1 // pred_region
      %96 = dma.done [#allocation6], 16
    $region53: #{tpu_custom_call.1} parent=1 // pred_fallthru
      _
    // Predicated region
    $region54: #{tpu_custom_call.1} parent=1 // pred_check
      _
    $region55: #{tpu_custom_call.1} parent=1 // pred_check_branch
      %98 = sbr.rel (0) target = $region57
    $region56: #{tpu_custom_call.1} parent=1 // pred_region
      %99 = dma.done [#allocation6], 16
    $region57: #{tpu_custom_call.1} parent=1 // pred_fallthru
      _
    // Predicated region
    $region58: #{tpu_custom_call.1} parent=1 // pred_check
      _
    $region59: #{tpu_custom_call.1} parent=1 // pred_check_branch
      %101 = sbr.rel (0) target = $region61
    $region60: #{tpu_custom_call.1} parent=1 // pred_region
      %102 = dma.done [#allocation9], 16
    $region61: #{tpu_custom_call.1} parent=1 // pred_fallthru
      _
    // Predicated region
    $region62: #{tpu_custom_call.1} parent=1 // pred_check
      _
    $region63: #{tpu_custom_call.1} parent=1 // pred_check_branch
      %104 = sbr.rel (0) target = $region65
    $region64: #{tpu_custom_call.1} parent=1 // pred_region
      %105 = dma.done [#allocation9], 16
    $region65: #{tpu_custom_call.1} parent=1 // pred_fallthru
      _
    // Predicated region
    $region66: #{tpu_custom_call.1} parent=1 // pred_check
      _
    $region67: #{tpu_custom_call.1} parent=1 // pred_check_branch
      %107 = sbr.rel (0) target = $region69
    $region68: #{tpu_custom_call.1} parent=1 // pred_region
      %108 = dma.done [#allocation12], 16
    $region69: #{tpu_custom_call.1} parent=1 // pred_fallthru
      _
    %v109 = vld [vmem:[#allocation2] sm:$0xff]
    %v110 = vld [vmem:[%s1] sm:$0xf]
    %v111 = vld [vmem:[%s1 + $0x4] sm:$0xf]
    %v112 = vld [vmem:[%s1 + $0x8] sm:$0xf]
    %v113 = vld [vmem:[%s1 + $0xc] sm:$0xf]
    %v114 = vld [vmem:[%s1 + $0x10] sm:$0xf]
    %v115 = vld [vmem:[%s1 + $0x14] sm:$0xf]
    %v116 = vld [vmem:[%s1 + $0x18] sm:$0xf]
    %v117 = vld [vmem:[%s1 + $0x1c] sm:$0xf]
    %vm118 = vcmask 388096
    %v119 = vsel %vm118, %v110, 0.0
    %v120 = vrot.slane %v119, 4
    %v121 = vadd.f32 %v119, %v120
    %v122 = vrot.slane %v121, 2
    %v123 = vadd.f32 %v121, %v122
    %v124 = vrot.slane %v123, 1
    %v125 = vadd.f32 %v123, %v124
    %v126 = vsel %vm118, %v111, 0.0
    %v127 = vrot.slane %v126, 4
    %v128 = vadd.f32 %v126, %v127
    %v129 = vrot.slane %v128, 2
    %v130 = vadd.f32 %v128, %v129
    %v131 = vrot.slane %v130, 1
    %v132 = vadd.f32 %v130, %v131
    %v133 = vsel %vm118, %v112, 0.0
    %v134 = vrot.slane %v133, 4
    %v135 = vadd.f32 %v133, %v134
    %v136 = vrot.slane %v135, 2
    %v137 = vadd.f32 %v135, %v136
    %v138 = vrot.slane %v137, 1
    %v139 = vadd.f32 %v137, %v138
    %v140 = vsel %vm118, %v113, 0.0
    %v141 = vrot.slane %v140, 4
    %v142 = vadd.f32 %v140, %v141
    %v143 = vrot.slane %v142, 2
    %v144 = vadd.f32 %v142, %v143
    %v145 = vrot.slane %v144, 1
    %v146 = vadd.f32 %v144, %v145
    %v147 = vsel %vm118, %v114, 0.0
    %v148 = vrot.slane %v147, 4
    %v149 = vadd.f32 %v147, %v148
    %v150 = vrot.slane %v149, 2
    %v151 = vadd.f32 %v149, %v150
    %v152 = vrot.slane %v151, 1
    %v153 = vadd.f32 %v151, %v152
    %v154 = vsel %vm118, %v115, 0.0
    %v155 = vrot.slane %v154, 4
    %v156 = vadd.f32 %v154, %v155
    %v157 = vrot.slane %v156, 2
    %v158 = vadd.f32 %v156, %v157
    %v159 = vrot.slane %v158, 1
    %v160 = vadd.f32 %v158, %v159
    %v161 = vsel %vm118, %v116, 0.0
    %v162 = vrot.slane %v161, 4
    %v163 = vadd.f32 %v161, %v162
    %v164 = vrot.slane %v163, 2
    %v165 = vadd.f32 %v163, %v164
    %v166 = vrot.slane %v165, 1
    %v167 = vadd.f32 %v165, %v166
    %v168 = vsel %vm118, %v117, 0.0
    %v169 = vrot.slane %v168, 4
    %v170 = vadd.f32 %v168, %v169
    %v171 = vrot.slane %v170, 2
    %v172 = vadd.f32 %v170, %v171
    %v173 = vrot.slane %v172, 1
    %v174 = vadd.f32 %v172, %v173
    %v175 = vrcp.pop 4.0
    %v176 = vmul.f32 %v125, %v175
    %v177 = vmul.f32 %v132, %v175
    %v178 = vmul.f32 %v139, %v175
    %v179 = vmul.f32 %v146, %v175
    %v180 = vmul.f32 %v153, %v175
    %v181 = vmul.f32 %v160, %v175
    %v182 = vmul.f32 %v167, %v175
    %v183 = vmul.f32 %v174, %v175
    %v184 = vld [vmem:[%s2] sm:$0xff]
    %v185 = vld [vmem:[%s2 + $0x8] sm:$0xff]
    %v186 = vld [vmem:[%s2 + $0x10] sm:$0xff]
    %v187 = vld [vmem:[%s2 + $0x18] sm:$0xff]
    %v188 = vld [vmem:[%s2 + $0x20] sm:$0xff]
    %v189 = vld [vmem:[%s2 + $0x28] sm:$0xff]
    %v190 = vld [vmem:[#allocation5] sm:$0x1]
    %v192 = vlaneseq
    %v193 = vshrl.u32 %v192, 7
    %v194 = vsub.s32 0, %v193
    %v195 = vrot.slane %v190, %v194
    %vm205 = vcmask 1041409
    %v206 = vsel %vm205, %v177, %v176
    %vm207 = vcmask 1042434
    %v208 = vsel %vm207, %v178, %v206
    %vm209 = vcmask 1043459
    %v210 = vsel %vm209, %v179, %v208
    %vm211 = vcmask 1044484
    %v212 = vsel %vm211, %v180, %v210
    %vm213 = vcmask 1045509
    %v214 = vsel %vm213, %v181, %v212
    %vm215 = vcmask 1046534
    %v216 = vsel %vm215, %v182, %v214
    %vm217 = vcmask 1047559
    %v218 = vsel %vm217, %v183, %v216
    %vm219 = vcmask 392192
    %v220 = vsel %vm219, %v218, 0
    %222 = vmatprep.subr.mxu0 0.0
    %223 = vmatpush1.msra.mxu0 0.0
    %224 = vmatprep.subr.mxu0 0.0
    %225 = vmatpush1.msra.mxu0 0.0
    %226 = vmatprep.subr.mxu0 0.0
    %227 = vmatpush1.msra.mxu0 0.0
    %228 = vmatprep.subr.mxu0 0.0
    %229 = vmatpush1.msra.mxu0 0.0
    %230 = vmatprep.subr.mxu0 0.0
    %231 = vmatpush1.msra.mxu0 0.0
    %232 = vmatprep.subr.mxu0 0.0
    %233 = vmatpush1.msra.mxu0 0.0
    %234 = vmatprep.subr.mxu0 0.0
    %235 = vmatpush1.msra.mxu0 0.0
    %236 = vmatprep.subr.mxu0 0.0
    %237 = vmatpush1.msra.mxu0 0.0
    %238 = vmatprep.subr.mxu0 0.0
    %239 = vmatpush1.msra.mxu0 0.0
    %240 = vmatprep.subr.mxu0 0.0
    %241 = vmatpush1.msra.mxu0 0.0
    %242 = vmatprep.subr.mxu0 0.0
    %243 = vmatpush1.msra.mxu0 %v189
    %244 = vmatprep.subr.mxu0 0.0
    %245 = vmatpush1.msra.mxu0 %v188
    %246 = vmatprep.subr.mxu0 0.0
    %247 = vmatpush1.msra.mxu0 %v187
    %248 = vmatprep.subr.mxu0 0.0
    %249 = vmatpush1.msra.mxu0 %v186
    %250 = vmatprep.subr.mxu0 0.0
    %251 = vmatpush1.msra.mxu0 %v185
    %252 = vmatprep.subr.mxu0 0.0
    %253 = vmatpush1.msra.mxu0 %v184
    %254 = vmatprep.subr.mxu0 0.0
    %255 = vmatpush2.msra.mxu0 0.0
    %256 = vmatprep.subr.mxu0 0.0
    %257 = vmatpush2.msra.mxu0 0.0
    %258 = vmatprep.subr.mxu0 0.0
    %259 = vmatpush2.msra.mxu0 0.0
    %260 = vmatprep.subr.mxu0 0.0
    %261 = vmatpush2.msra.mxu0 0.0
    %262 = vmatprep.subr.mxu0 0.0
    %263 = vmatpush2.msra.mxu0 0.0
    %264 = vmatprep.subr.mxu0 0.0
    %265 = vmatpush2.msra.mxu0 0.0
    %266 = vmatprep.subr.mxu0 0.0
    %267 = vmatpush2.msra.mxu0 0.0
    %268 = vmatprep.subr.mxu0 0.0
    %269 = vmatpush2.msra.mxu0 0.0
    %270 = vmatprep.subr.mxu0 0.0
    %271 = vmatpush2.msra.mxu0 0.0
    %272 = vmatprep.subr.mxu0 0.0
    %273 = vmatpush2.msra.mxu0 0.0
    %274 = vmatprep.subr.mxu0 0.0
    %275 = vmatpush2.msra.mxu0 0.0
    %276 = vmatprep.subr.mxu0 0.0
    %277 = vmatpush2.msra.mxu0 0.0
    %278 = vmatprep.subr.mxu0 0.0
    %279 = vmatpush2.msra.mxu0 0.0
    %280 = vmatprep.subr.mxu0 0.0
    %281 = vmatpush2.msra.mxu0 0.0
    %282 = vmatprep.subr.mxu0 0.0
    %283 = vmatpush2.msra.mxu0 0.0
    %284 = vmatprep.subr.mxu0 0.0
    %285 = vmatpush2.msra.mxu0 0.0
    %286 = vmatprep.mubr.f32.mxu0 0.0
    %287 = vmatmul.mubr.f32.gmra.mxu0 %v220
    %v288 = vpop.f32.mrf.mxu0
    %v289 = vadd.f32 %v195, %v288
    %v290 = vpop.f32.mrf.mxu0
    %291 = vdwg.mxu0
    %vm292 = vcmask 261120
    %v293 = vsel %vm292, %v109, 0.0
    %294 = vadd.xlane.f32.xlu0 %v293
    %v295 = vpop.xlane.xlu0 %294
    %v296 = vsel %vm292, %v289, 0.0
    %297 = vadd.xlane.f32.xlu0 %v296
    %v298 = vpop.xlane.xlu0 %297
    %v299 = vadd.f32 %v295, %v298
    %v300 = vrcp.pop 64.0
    %v301 = vmul.f32 %v299, %v300
    %v302 = vsub.f32 %v109, %v301
    %v303 = vmul.f32 %v302, %v302
    %v304 = vsel %vm292, %v303, 0.0
    %305 = vadd.xlane.f32.xlu0 %v304
    %v306 = vpop.xlane.xlu0 %305
    %v307 = vsub.f32 %v289, %v301
    %v308 = vmul.f32 %v307, %v307
    %v309 = vsel %vm292, %v308, 0.0
    %310 = vadd.xlane.f32.xlu0 %v309
    %v311 = vpop.xlane.xlu0 %310
    %v312 = vadd.f32 %v306, %v311
    %v313 = vmul.f32 %v312, %v300
    %v314 = vadd.f32 %v313, 1e-05
    %v315 = vrsqrt.pop %v314
    %v316 = vmul.f32 %v302, %v315
    %v317 = vld [vmem:[#allocation7] sm:$0x1]
    %v319 = vlaneseq
    %v320 = vshrl.u32 %v319, 7
    %v321 = vsub.s32 0, %v320
    %v322 = vrot.slane %v317, %v321
    %v324 = vmul.f32 %v316, %v322
    %v325 = vld [vmem:[#allocation10] sm:$0x1]
    %v327 = vlaneseq
    %v328 = vshrl.u32 %v327, 7
    %v329 = vsub.s32 0, %v328
    %v330 = vrot.slane %v325, %v329
    %v332 = vadd.f32 %v324, %v330
    %v333 = vmul.f32 %v307, %v315
    %v334 = vld [vmem:[#allocation8] sm:$0x1]
    %v336 = vlaneseq
    %v337 = vshrl.u32 %v336, 7
    %v338 = vsub.s32 0, %v337
    %v339 = vrot.slane %v334, %v338
    %v341 = vmul.f32 %v333, %v339
    %v342 = vld [vmem:[#allocation11] sm:$0x1]
    %v344 = vlaneseq
    %v345 = vshrl.u32 %v344, 7
    %v346 = vsub.s32 0, %v345
    %v347 = vrot.slane %v342, %v346
    %v349 = vadd.f32 %v341, %v347
    %v350 = vmul.f32 %v332, 0.5
    %v351 = vmul.f32 %v332, 0.70710677
    %v352 = verf.f32.pop %v351
    %v353 = vadd.f32 %v352, 1.0
    %v354 = vmul.f32 %v350, %v353
    %v355 = vmul.f32 %v349, 0.5
    %v356 = vmul.f32 %v349, 0.70710677
    %v357 = verf.f32.pop %v356
    %v358 = vadd.f32 %v357, 1.0
    %v359 = vmul.f32 %v355, %v358
    %v360 = vld [vmem:[%s8] sm:$0xff]
    %v361 = vld [vmem:[%s8 + $0x8] sm:$0xff]
    %v362 = vld [vmem:[%s8 + $0x10] sm:$0xff]
    %v363 = vld [vmem:[%s8 + $0x18] sm:$0xff]
    %v364 = vld [vmem:[%s9] sm:$0xff]
    %v365 = vld [vmem:[%s9 + $0x8] sm:$0xff]
    %v366 = vld [vmem:[%s9 + $0x10] sm:$0xff]
    %v367 = vld [vmem:[%s9 + $0x18] sm:$0xff]
    %v369 = vsel %vm292, %v359, 0
    %371 = vmatprep.subr.mxu0 0.0
    %372 = vmatpush1.msra.mxu0 0.0
    %373 = vmatprep.subr.mxu0 0.0
    %374 = vmatpush1.msra.mxu0 0.0
    %375 = vmatprep.subr.mxu0 0.0
    %376 = vmatpush1.msra.mxu0 0.0
    %377 = vmatprep.subr.mxu0 0.0
    %378 = vmatpush1.msra.mxu0 0.0
    %379 = vmatprep.subr.mxu0 0.0
    %380 = vmatpush1.msra.mxu0 0.0
    %381 = vmatprep.subr.mxu0 0.0
    %382 = vmatpush1.msra.mxu0 0.0
    %383 = vmatprep.subr.mxu0 0.0
    %384 = vmatpush1.msra.mxu0 0.0
    %385 = vmatprep.subr.mxu0 0.0
    %386 = vmatpush1.msra.mxu0 0.0
    %387 = vmatprep.subr.mxu0 0.0
    %388 = vmatpush1.msra.mxu0 0.0
    %389 = vmatprep.subr.mxu0 0.0
    %390 = vmatpush1.msra.mxu0 0.0
    %391 = vmatprep.subr.mxu0 0.0
    %392 = vmatpush1.msra.mxu0 0.0
    %393 = vmatprep.subr.mxu0 0.0
    %394 = vmatpush1.msra.mxu0 0.0
    %395 = vmatprep.subr.mxu0 0.0
    %396 = vmatpush1.msra.mxu0 %v367
    %397 = vmatprep.subr.mxu0 0.0
    %398 = vmatpush1.msra.mxu0 %v366
    %399 = vmatprep.subr.mxu0 0.0
    %400 = vmatpush1.msra.mxu0 %v365
    %401 = vmatprep.subr.mxu0 0.0
    %402 = vmatpush1.msra.mxu0 %v364
    %403 = vmatprep.subr.mxu0 0.0
    %404 = vmatpush2.msra.mxu0 0.0
    %405 = vmatprep.subr.mxu0 0.0
    %406 = vmatpush2.msra.mxu0 0.0
    %407 = vmatprep.subr.mxu0 0.0
    %408 = vmatpush2.msra.mxu0 0.0
    %409 = vmatprep.subr.mxu0 0.0
    %410 = vmatpush2.msra.mxu0 0.0
    %411 = vmatprep.subr.mxu0 0.0
    %412 = vmatpush2.msra.mxu0 0.0
    %413 = vmatprep.subr.mxu0 0.0
    %414 = vmatpush2.msra.mxu0 0.0
    %415 = vmatprep.subr.mxu0 0.0
    %416 = vmatpush2.msra.mxu0 0.0
    %417 = vmatprep.subr.mxu0 0.0
    %418 = vmatpush2.msra.mxu0 0.0
    %419 = vmatprep.subr.mxu0 0.0
    %420 = vmatpush2.msra.mxu0 0.0
    %421 = vmatprep.subr.mxu0 0.0
    %422 = vmatpush2.msra.mxu0 0.0
    %423 = vmatprep.subr.mxu0 0.0
    %424 = vmatpush2.msra.mxu0 0.0
    %425 = vmatprep.subr.mxu0 0.0
    %426 = vmatpush2.msra.mxu0 0.0
    %427 = vmatprep.subr.mxu0 0.0
    %428 = vmatpush2.msra.mxu0 0.0
    %429 = vmatprep.subr.mxu0 0.0
    %430 = vmatpush2.msra.mxu0 0.0
    %431 = vmatprep.subr.mxu0 0.0
    %432 = vmatpush2.msra.mxu0 0.0
    %433 = vmatprep.subr.mxu0 0.0
    %434 = vmatpush2.msra.mxu0 0.0
    %435 = vmatprep.mubr.f32.mxu0 0.0
    %436 = vmatmul.mubr.f32.gmra.mxu0 %v369
    %v437 = vpop.f32.mrf.mxu0
    %v438 = vadd.f32 0.0, %v437
    %v439 = vpop.f32.mrf.mxu0
    %440 = vdwg.mxu0
    %v442 = vsel %vm292, %v354, 0
    %444 = vmatprep.subr.mxu0 0.0
    %445 = vmatpush1.msra.mxu0 0.0
    %446 = vmatprep.subr.mxu0 0.0
    %447 = vmatpush1.msra.mxu0 0.0
    %448 = vmatprep.subr.mxu0 0.0
    %449 = vmatpush1.msra.mxu0 0.0
    %450 = vmatprep.subr.mxu0 0.0
    %451 = vmatpush1.msra.mxu0 0.0
    %452 = vmatprep.subr.mxu0 0.0
    %453 = vmatpush1.msra.mxu0 0.0
    %454 = vmatprep.subr.mxu0 0.0
    %455 = vmatpush1.msra.mxu0 0.0
    %456 = vmatprep.subr.mxu0 0.0
    %457 = vmatpush1.msra.mxu0 0.0
    %458 = vmatprep.subr.mxu0 0.0
    %459 = vmatpush1.msra.mxu0 0.0
    %460 = vmatprep.subr.mxu0 0.0
    %461 = vmatpush1.msra.mxu0 0.0
    %462 = vmatprep.subr.mxu0 0.0
    %463 = vmatpush1.msra.mxu0 0.0
    %464 = vmatprep.subr.mxu0 0.0
    %465 = vmatpush1.msra.mxu0 0.0
    %466 = vmatprep.subr.mxu0 0.0
    %467 = vmatpush1.msra.mxu0 0.0
    %468 = vmatprep.subr.mxu0 0.0
    %469 = vmatpush1.msra.mxu0 %v363
    %470 = vmatprep.subr.mxu0 0.0
    %471 = vmatpush1.msra.mxu0 %v362
    %472 = vmatprep.subr.mxu0 0.0
    %473 = vmatpush1.msra.mxu0 %v361
    %474 = vmatprep.subr.mxu0 0.0
    %475 = vmatpush1.msra.mxu0 %v360
    %476 = vmatprep.subr.mxu0 0.0
    %477 = vmatpush2.msra.mxu0 0.0
    %478 = vmatprep.subr.mxu0 0.0
    %479 = vmatpush2.msra.mxu0 0.0
    %480 = vmatprep.subr.mxu0 0.0
    %481 = vmatpush2.msra.mxu0 0.0
    %482 = vmatprep.subr.mxu0 0.0
    %483 = vmatpush2.msra.mxu0 0.0
    %484 = vmatprep.subr.mxu0 0.0
    %485 = vmatpush2.msra.mxu0 0.0
    %486 = vmatprep.subr.mxu0 0.0
    %487 = vmatpush2.msra.mxu0 0.0
    %488 = vmatprep.subr.mxu0 0.0
    %489 = vmatpush2.msra.mxu0 0.0
    %490 = vmatprep.subr.mxu0 0.0
    %491 = vmatpush2.msra.mxu0 0.0
    %492 = vmatprep.subr.mxu0 0.0
    %493 = vmatpush2.msra.mxu0 0.0
    %494 = vmatprep.subr.mxu0 0.0
    %495 = vmatpush2.msra.mxu0 0.0
    %496 = vmatprep.subr.mxu0 0.0
    %497 = vmatpush2.msra.mxu0 0.0
    %498 = vmatprep.subr.mxu0 0.0
    %499 = vmatpush2.msra.mxu0 0.0
    %500 = vmatprep.subr.mxu0 0.0
    %501 = vmatpush2.msra.mxu0 0.0
    %502 = vmatprep.subr.mxu0 0.0
    %503 = vmatpush2.msra.mxu0 0.0
    %504 = vmatprep.subr.mxu0 0.0
    %505 = vmatpush2.msra.mxu0 0.0
    %506 = vmatprep.subr.mxu0 0.0
    %507 = vmatpush2.msra.mxu0 0.0
    %508 = vmatprep.mubr.f32.mxu0 0.0
    %509 = vmatmul.mubr.f32.gmra.mxu0 %v442
    %v510 = vpop.f32.mrf.mxu0
    %v511 = vadd.f32 %v438, %v510
    %v512 = vpop.f32.mrf.mxu0
    %513 = vdwg.mxu0
    %v514 = vld [vmem:[%s10] sm:$0x1]
    %v516 = vlaneseq
    %v517 = vshrl.u32 %v516, 7
    %v518 = vsub.s32 0, %v517
    %v519 = vrot.slane %v514, %v518
    %v521 = vadd.f32 %v511, %v519
    %522 = vst [vmem:[#allocation13] sm:$0xff] %v521
    // Predicated region
    $region70: #{tpu_custom_call.1} parent=1 // pred_check
      _
    $region71: #{tpu_custom_call.1} parent=1 // pred_check_branch
      %524 = sbr.rel (0) target = $region73
    $region72: #{tpu_custom_call.1} parent=1 // pred_region
      %s526 = ssub.s32 128, 128
      %527 = vsyncadd [#allocation4], %s526
      %s529 = sshll.u32 [#allocation13], 4
      %s530 = int_to_ptr.vmem [resolvable:$true] %s529
      %532 = dma.vmem_to_hbm [thread:$0]  %s530, 128, %s11, [#allocation4]
    $region73: #{tpu_custom_call.1} parent=1 // pred_fallthru
      _
    // Predicated region
    $region74: #{tpu_custom_call.1} parent=1 // pred_check
      _
    $region75: #{tpu_custom_call.1} parent=1 // pred_check_branch
      %534 = sbr.rel (0) target = $region77
    $region76: #{tpu_custom_call.1} parent=1 // pred_region
      %535 = dma.done [#allocation4], 128
    $region77: #{tpu_custom_call.1} parent=1 // pred_fallthru
      _
    %536 = vsyncpa [#allocation3], 1
    %537 = vsyncpa [#allocation6], 1
    %538 = vsyncpa [#allocation9], 1
    %539 = vsyncpa [#allocation12], 1
    %540 = vsyncpa [#allocation4], 1

</llo_original>
